<compile_context>
chip_gen: v5e
topology: v5e:2x2
jax: 0.10.0
libtpu: 0.0.40
codegen_flags: <defaults>
</compile_context>

<pallas_src>
import math

import jax
import jax.numpy as jnp
from jax.experimental import pallas as pl
from jax.experimental.pallas import tpu as pltpu


# ---------------------------------------------------------------------------
# Buffer construction — mirrors StackedObsPositionalEncoding.__init__
# ---------------------------------------------------------------------------
def make_pe(max_len, d_model, num_stacked_obss, include_initial_cls_token=False):
    if not include_initial_cls_token:
        assert max_len % num_stacked_obss == 0
        position = jnp.repeat(
            jnp.arange(max_len // num_stacked_obss), num_stacked_obss
        )[:, None].astype(jnp.float32)
    else:
        assert (max_len - 1) % num_stacked_obss == 0
        position = jnp.repeat(
            jnp.arange((max_len - 1) // num_stacked_obss), num_stacked_obss
        )
        position = jnp.concatenate([jnp.array([0]), position + 1], axis=0)
        position = position[:, None].astype(jnp.float32)

    div_term = jnp.exp(
        jnp.arange(0, d_model, 2, dtype=jnp.float32) * (-math.log(10000.0) / d_model)
    )
    pe = jnp.zeros((max_len, 1, d_model), dtype=jnp.float32)
    pe = pe.at[:, 0, 0::2].set(jnp.sin(position * div_term) * 0.001)
    pe = pe.at[:, 0, 1::2].set(jnp.cos(position * div_term) * 0.001)
    return pe


def _round_up(x, m):
    return ((x + m - 1) // m) * m


# ---------------------------------------------------------------------------
# Pallas kernel: streaming broadcast-add, tiled over (seq rows, d_model chunks)
# ---------------------------------------------------------------------------
def _pe_add_kernel(x_ref, pe_ref, o_ref):
    # x_ref/o_ref: (ts, batch, tc) in x.dtype; pe_ref: (ts, 1, tc) float32.
    # Add in f32 (keeps the 1e-3-scaled encoding from rounding away for low-
    # precision activations), cast once on store.
    x = x_ref[...].astype(jnp.float32)
    o_ref[...] = (x + pe_ref[...]).astype(o_ref.dtype)


def stacked_obs_positional_encoding(x, pe, dropout_p=0.0):
    """Forward pass.

    x:  [seq_len, batch, d_model]
    pe: [max_len, 1, d_model] float32  (the module's registered buffer, unchanged)
    """
    # Dropout with p=0.0 (module default) is the identity.
    # TODO(synk): non-zero dropout would need pltpu.prng_seed/prng_random_bits
    # masking inside the kernel.
    assert dropout_p == 0.0

    seq_len, batch, d_model = x.shape
    max_len, pe_one, pe_d = pe.shape
    assert pe_one == 1 and pe_d == d_model, "pe buffer shape mismatch"
    assert seq_len <= max_len, f"seq_len {seq_len} exceeds max_len {max_len}"

    itemsize = jnp.dtype(x.dtype).itemsize
    pack = max(1, 4 // itemsize)          # sublane packing factor for sub-32-bit dtypes
    b_pad = _round_up(batch, 8 * pack)    # padded sublane extent of an x/out tile

    TOTAL_VMEM_BUDGET = 40 * 1024 * 1024  # working-set target; safe inside v7x's 64 MiB
    MIN_ROW_BLOCKS = 8                    # >=2 keeps both v7x TCs busy; ~8 amortizes step cost

    def step_bytes(rows, lanes):
        """Padded VMEM bytes of one pipeline step: x tile + out tile + pe tile."""
        dpad = _round_up(lanes, 128)
        return rows * (2 * b_pad * dpad * itemsize + 8 * dpad * 4)

    # ---- lane-axis (d_model) chunk: only tile when a minimal 8-row step would
    # ---- blow the VMEM budget (large batch*d_model case) ---------------------
    tc = d_model
    if d_model > 128 and 2 * step_bytes(8, d_model) > TOTAL_VMEM_BUDGET:
        per_chunk = 2 * step_bytes(8, 128)          # double-buffered 8-row, 128-lane chunk
        n_chunks = max(1, TOTAL_VMEM_BUDGET // per_chunk)
        tc = 128 * n_chunks
        if tc >= d_model:
            tc = d_model
    # TODO(synk): if batch alone is huge (8-row, 128-lane tile still over budget)
    # a third grid axis tiling the batch dim would be needed.

    # ---- row (sequence) chunk ------------------------------------------------
    rows_budget = max(8, ((TOTAL_VMEM_BUDGET // (2 * step_bytes(1, tc))) // 8) * 8)
    desired = max(8, _round_up(pl.cdiv(seq_len, MIN_ROW_BLOCKS), 8))
    ts = max(1, min(rows_budget, desired, seq_len))

    grid = (pl.cdiv(seq_len, ts), pl.cdiv(d_model, tc))

    vmem_need = 2 * step_bytes(ts, tc) + 2 * 1024 * 1024
    vmem_limit = int(min(max(vmem_need, 16 * 1024 * 1024), 100 * 1024 * 1024))

    bytes_accessed = (
        2 * seq_len * batch * d_model * itemsize   # read x + write out
        + seq_len * d_model * 4                    # un-broadcast pe stream
    )

    out = pl.pallas_call(
        _pe_add_kernel,
        out_shape=jax.ShapeDtypeStruct((seq_len, batch, d_model), x.dtype),
        grid_spec=pl.GridSpec(
            grid=grid,
            in_specs=[
                # x: (ts, batch, tc) — batch is a full dim, tc is 128-multiple or full.
                pl.BlockSpec((ts, batch, tc), lambda i, j: (i, 0, j)),
                # pe: (ts, 1, tc) — same row/lane block indices as x; broadcast in-kernel.
                pl.BlockSpec((ts, 1, tc), lambda i, j: (i, 0, j)),
            ],
            out_specs=pl.BlockSpec((ts, batch, tc), lambda i, j: (i, 0, j)),
        ),
        compiler_params=pltpu.CompilerParams(
            dimension_semantics=("parallel", "parallel"),
            vmem_limit_bytes=vmem_limit,
        ),
        cost_estimate=pl.CostEstimate(
            flops=seq_len * batch * d_model,
            transcendentals=0,
            bytes_accessed=bytes_accessed,
        ),
    )(x, pe)
    return out


if __name__ == "__main__":
    key = jax.random.PRNGKey(0)
    fwd = jax.jit(stacked_obs_positional_encoding)

    configs = [
        # (seq_len, batch, d_model, max_len, num_stacked_obss)
        (8, 2, 32, 16, 2),     # tiny shape, single-block grid, max_len > seq_len
        (12, 4, 128, 20, 4),   # lane-dense d_model, 2 row blocks with a ragged last block
    ]

    ok = True
    for idx, (seq_len, batch, d_model, max_len, n_stack) in enumerate(configs):
        key, sub = jax.random.split(key)
        x = jax.random.normal(sub, (seq_len, batch, d_model), dtype=jnp.float32)
        pe = make_pe(max_len, d_model, n_stack, include_initial_cls_token=False)

        ref = x + pe[:seq_len]                     # pure-JAX reference
        out = jax.block_until_ready(fwd(x, pe))

        ok &= out.shape == (seq_len, batch, d_model)
        ok &= bool(jnp.allclose(out, ref, atol=1e-6))

    assert ok, "mismatch vs reference"
    print("KERNEL_OK")
</pallas_src>

<mosaic_0001>
module attributes {stable_mosaic.version = 11 : i64} {
  func.func @_pe_add_kernel(%arg0: i32, %arg1: i32, %arg2: memref<8x2x32xf32, #tpu.memory_space<vmem>>, %arg3: memref<8x1x32xf32, #tpu.memory_space<vmem>>, %arg4: memref<8x2x32xf32, #tpu.memory_space<vmem>>) attributes {dimension_semantics = [#tpu.dimension_semantics<parallel>, #tpu.dimension_semantics<parallel>], iteration_bounds = array<i64: 1, 1>, scalar_prefetch = 0 : i64, scratch_operands = 0 : i64, tpu.core_type = #tpu.core_type<tc>, window_params = [{transform_indices = @transform_0, window_bounds = array<i64: 8, 2, 32>}, {transform_indices = @transform_1, window_bounds = array<i64: 8, 1, 32>}, {transform_indices = @transform_2, window_bounds = array<i64: 8, 2, 32>}]} {
    %c0 = arith.constant 0 : index
    %c0_0 = arith.constant 0 : index
    %c0_1 = arith.constant 0 : index
    %0 = vector.load %arg2[%c0, %c0_0, %c0_1] : memref<8x2x32xf32, #tpu.memory_space<vmem>>, vector<8x2x32xf32>
    %c0_2 = arith.constant 0 : index
    %c0_3 = arith.constant 0 : index
    %c0_4 = arith.constant 0 : index
    %1 = vector.load %arg3[%c0_2, %c0_3, %c0_4] : memref<8x1x32xf32, #tpu.memory_space<vmem>>, vector<8x1x32xf32>
    %2 = vector.broadcast %1 : vector<8x1x32xf32> to vector<8x2x32xf32>
    %3 = arith.addf %0, %2 : vector<8x2x32xf32>
    %c0_5 = arith.constant 0 : index
    %c0_6 = arith.constant 0 : index
    %c0_7 = arith.constant 0 : index
    %4 = vector.load %arg4[%c0_5, %c0_6, %c0_7] : memref<8x2x32xf32, #tpu.memory_space<vmem>>, vector<8x2x32xf32>
    tpu.vector_store %arg4[%c0_5, %c0_6, %c0_7], %3 {strides = array<i32>} : memref<8x2x32xf32, #tpu.memory_space<vmem>>, vector<8x2x32xf32>,
    return
  }
  func.func @transform_0(%arg0: i32, %arg1: i32) -> (i32, i32, i32) {
    %c0_i32 = arith.constant 0 : i32
    %c0_i32_0 = arith.constant 0 : i32
    return %arg0, %c0_i32, %arg1 : i32, i32, i32
  }
  func.func @transform_1(%arg0: i32, %arg1: i32) -> (i32, i32, i32) {
    %c0_i32 = arith.constant 0 : i32
    %c0_i32_0 = arith.constant 0 : i32
    return %arg0, %c0_i32, %arg1 : i32, i32, i32
  }
  func.func @transform_2(%arg0: i32, %arg1: i32) -> (i32, i32, i32) {
    %c0_i32 = arith.constant 0 : i32
    %c0_i32_0 = arith.constant 0 : i32
    return %arg0, %c0_i32, %arg1 : i32, i32, i32
  }
}

</mosaic_0001>

<llo_original>
// kernel: stacked_obs_positional_encoding.1
$region0: #{stacked_obs_positional_encoding.1}
  #allocation0 [shape = 'u32[]', space=smem, size = 0x4, offset = 0x4, fixed_abs, tag = 'smem constant byte address 0x4 - core index']
  #allocation1 [shape = 'u32[72,128]{1,0:T(1,128)}', space=vmem, size = 0x9000, scoped, tag = 'internal scratch']
  %s0 = inlined_call_operand.hbm [shape: f32[8,2,32], index: 0, kind: input, shape index: {}]
  %s1 = inlined_call_operand.hbm [shape: f32[16,1,32], index: 1, kind: input, shape index: {}]
  %s2 = inlined_call_operand.hbm [shape: f32[8,2,32], index: 2, kind: output, shape index: {}]
  %s3 = sld [smem:[#allocation0]]
  $region26: #{stacked_obs_positional_encoding.1} parent=0
    _
  %s5 = ssub.s32 1, %s3
  %s6 = scalar_select 0, %s5, %s3
  $region1: #{stacked_obs_positional_encoding.1} parent=0
    #allocation2 [shape = 'u8[8192]{0}', space=vmem, size = 0x2000, scoped, tag = 'input window, operand 0, single buffered']
    #allocation3 [shape = 's32[1]{0}', space=sflag, size = 0x4, scoped, tag = 'scoped memory for stacked_obs_positional_encoding.1']
    #allocation4 [shape = 's32[1]{0}', space=sflag, size = 0x4, scoped, tag = 'scoped memory for stacked_obs_positional_encoding.1']
    #allocation5 [shape = 'u8[4096]{0}', space=vmem, size = 0x1000, scoped, tag = 'input window, operand 1, single buffered']
    #allocation6 [shape = 's32[1]{0}', space=sflag, size = 0x4, scoped, tag = 'scoped memory for stacked_obs_positional_encoding.1']
    #allocation7 [shape = 'u8[8192]{0}', space=vmem, size = 0x2000, scoped, tag = 'output window, operand 0, single buffered']
    %7 = vsyncpa [#allocation3], 0
    %8 = vsyncpa [#allocation6], 0
    %9 = vsyncpa [#allocation4], 0
    // Predicated region
    $region2: #{stacked_obs_positional_encoding.1} parent=1 // pred_check
      _
    $region3: #{stacked_obs_positional_encoding.1} parent=1 // pred_check_branch
      %11 = sbr.rel (0) target = $region5
    $region4: #{stacked_obs_positional_encoding.1} parent=1 // pred_region
      %13 = vsyncadd [#allocation3], 0
      %s14 = sshll.u32 %s0, 4
      %s15 = int_to_ptr.hbm [resolvable:$true] %s14
      %s16 = sshll.u32 [#allocation2], 4
      %s17 = int_to_ptr.vmem [resolvable:$true] %s16
      %22 = dma.hbm_to_vmem [thread:$0]  %s15, 256, %s17, [#allocation3], 32, 32, 2
    $region5: #{stacked_obs_positional_encoding.1} parent=1 // pred_fallthru
      _
    // Predicated region
    $region6: #{stacked_obs_positional_encoding.1} parent=1 // pred_check
      _
    $region7: #{stacked_obs_positional_encoding.1} parent=1 // pred_check_branch
      %24 = sbr.rel (0) target = $region9
    $region8: #{stacked_obs_positional_encoding.1} parent=1 // pred_region
      %26 = vsyncadd [#allocation6], 0
      %s27 = sshll.u32 %s1, 4
      %s28 = int_to_ptr.hbm [resolvable:$true] %s27
      %s29 = sshll.u32 [#allocation5], 4
      %s30 = int_to_ptr.vmem [resolvable:$true] %s29
      %35 = dma.hbm_to_vmem [thread:$0]  %s28, 128, %s30, [#allocation6], 16, 16, 1
    $region9: #{stacked_obs_positional_encoding.1} parent=1 // pred_fallthru
      _
    // Predicated region
    $region10: #{stacked_obs_positional_encoding.1} parent=1 // pred_check
      _
    $region11: #{stacked_obs_positional_encoding.1} parent=1 // pred_check_branch
      %37 = sbr.rel (0) target = $region13
    $region12: #{stacked_obs_positional_encoding.1} parent=1 // pred_region
      %39 = dma.done [#allocation3], 256
    $region13: #{stacked_obs_positional_encoding.1} parent=1 // pred_fallthru
      _
    // Predicated region
    $region14: #{stacked_obs_positional_encoding.1} parent=1 // pred_check
      _
    $region15: #{stacked_obs_positional_encoding.1} parent=1 // pred_check_branch
      %41 = sbr.rel (0) target = $region17
    $region16: #{stacked_obs_positional_encoding.1} parent=1 // pred_region
      %43 = dma.done [#allocation6], 128
    $region17: #{stacked_obs_positional_encoding.1} parent=1 // pred_fallthru
      _
    %v44 = vld [vmem:[#allocation2] sm:$0x3]
    %v45 = vld [vmem:[#allocation2 + $0x2] sm:$0x3]
    %v46 = vld [vmem:[#allocation2 + $0x4] sm:$0x3]
    %v47 = vld [vmem:[#allocation2 + $0x6] sm:$0x3]
    %v48 = vld [vmem:[#allocation2 + $0x8] sm:$0x3]
    %v49 = vld [vmem:[#allocation2 + $0xa] sm:$0x3]
    %v50 = vld [vmem:[#allocation2 + $0xc] sm:$0x3]
    %v51 = vld [vmem:[#allocation2 + $0xe] sm:$0x3]
    %v52 = vld [vmem:[#allocation5] sm:$0x1]
    %v53 = vld [vmem:[#allocation5 + $0x1] sm:$0x1]
    %v54 = vld [vmem:[#allocation5 + $0x2] sm:$0x1]
    %v55 = vld [vmem:[#allocation5 + $0x3] sm:$0x1]
    %v56 = vld [vmem:[#allocation5 + $0x4] sm:$0x1]
    %v57 = vld [vmem:[#allocation5 + $0x5] sm:$0x1]
    %v58 = vld [vmem:[#allocation5 + $0x6] sm:$0x1]
    %v59 = vld [vmem:[#allocation5 + $0x7] sm:$0x1]
    %v68 = vperm.slane %v52, 0
    %v69 = vperm.slane %v53, 0
    %v70 = vperm.slane %v54, 0
    %v71 = vperm.slane %v55, 0
    %v72 = vperm.slane %v56, 0
    %v73 = vperm.slane %v57, 0
    %v74 = vperm.slane %v58, 0
    %v75 = vperm.slane %v59, 0
    %v84 = vadd.f32 %v44, %v68
    %v85 = vadd.f32 %v45, %v69
    %v86 = vadd.f32 %v46, %v70
    %v87 = vadd.f32 %v47, %v71
    %v88 = vadd.f32 %v48, %v72
    %v89 = vadd.f32 %v49, %v73
    %v90 = vadd.f32 %v50, %v74
    %v91 = vadd.f32 %v51, %v75
    %vm92 = vcmask 254976
    %93 = vst.msk [vmem:[#allocation7] sm:$0x3] %vm92, %v84
    %94 = vst.msk [vmem:[#allocation7 + $0x2] sm:$0x3] %vm92, %v85
    %95 = vst.msk [vmem:[#allocation7 + $0x4] sm:$0x3] %vm92, %v86
    %96 = vst.msk [vmem:[#allocation7 + $0x6] sm:$0x3] %vm92, %v87
    %97 = vst.msk [vmem:[#allocation7 + $0x8] sm:$0x3] %vm92, %v88
    %98 = vst.msk [vmem:[#allocation7 + $0xa] sm:$0x3] %vm92, %v89
    %99 = vst.msk [vmem:[#allocation7 + $0xc] sm:$0x3] %vm92, %v90
    %100 = vst.msk [vmem:[#allocation7 + $0xe] sm:$0x3] %vm92, %v91
    // Predicated region
    $region18: #{stacked_obs_positional_encoding.1} parent=1 // pred_check
      _
    $region19: #{stacked_obs_positional_encoding.1} parent=1 // pred_check_branch
      %102 = sbr.rel (0) target = $region21
    $region20: #{stacked_obs_positional_encoding.1} parent=1 // pred_region
      %104 = vsyncadd [#allocation4], 0
      %s105 = sshll.u32 [#allocation7], 4
      %s106 = int_to_ptr.vmem [resolvable:$true] %s105
      %s107 = sshll.u32 %s2, 4
      %s108 = int_to_ptr.hbm [resolvable:$true] %s107
      %113 = dma.vmem_to_hbm [thread:$0]  %s106, 256, %s108, [#allocation4], 32, 32, 2
    $region21: #{stacked_obs_positional_encoding.1} parent=1 // pred_fallthru
      _
    // Predicated region
    $region22: #{stacked_obs_positional_encoding.1} parent=1 // pred_check
      _
    $region23: #{stacked_obs_positional_encoding.1} parent=1 // pred_check_branch
      %115 = sbr.rel (0) target = $region25
    $region24: #{stacked_obs_positional_encoding.1} parent=1 // pred_region
      %117 = dma.done [#allocation4], 256
    $region25: #{stacked_obs_positional_encoding.1} parent=1 // pred_fallthru
      _
    %118 = vsyncpa [#allocation3], 1
    %119 = vsyncpa [#allocation6], 1
    %120 = vsyncpa [#allocation4], 1

</llo_original>
